<compile_context>
chip_gen: v7x
topology: tpu7x:2x2x1
jax: 0.10.0
libtpu: 0.0.40
codegen_flags: <defaults>
</compile_context>

<pallas_src>
import functools
import math

import jax
import jax.numpy as jnp
from jax.experimental import pallas as pl
from jax.experimental.pallas import tpu as pltpu


# --------------------------------------------------------------------------
# Kernel 1: fused QKV projection -> head-major Q/K/V
# --------------------------------------------------------------------------
def _qkv_proj_kernel(x_ref, wqkv_ref, bqkv_ref, q_ref, k_ref, v_ref,
                     *, num_heads: int, head_size: int):
    """x_ref: (1,tS,H)  wqkv: (H,3H)  bqkv: (1,3H)  q/k/v out: (1,nh,tS,hs)."""
    H = num_heads * head_size
    x = x_ref[0]                                              # (tS, H)
    tS = x.shape[0]
    qkv = jnp.dot(x, wqkv_ref[...],
                  preferred_element_type=jnp.float32)         # f32 accumulation
    qkv = qkv + bqkv_ref[...]                                 # (tS, 3H)

    scale = head_size ** -0.5                                 # fold 1/sqrt(d_k) into Q

    # One relayout per operand instead of a per-head slice/store loop:
    # (tS, H) -> (tS, nh, hs) -> (nh, tS, hs), then a single full-tile store.
    def to_heads(block):
        return jnp.swapaxes(block.reshape(tS, num_heads, head_size), 0, 1)

    q_ref[0] = to_heads(qkv[:, 0 * H:1 * H] * scale).astype(q_ref.dtype)
    k_ref[0] = to_heads(qkv[:, 1 * H:2 * H]).astype(k_ref.dtype)
    v_ref[0] = to_heads(qkv[:, 2 * H:3 * H]).astype(v_ref.dtype)


# --------------------------------------------------------------------------
# Kernel 2: causal flash attention + fused output projection
# --------------------------------------------------------------------------
def _flash_attn_kernel(q_ref, k_ref, v_ref, wo_ref, bo_ref, o_ref,
                       m_scr, l_scr, acc_scr,
                       *, approx_reciprocal: bool):
    """grid = (batch, q_tiles, k_tiles); k axis is the (sequential) reduction.

    q_ref/k_ref/v_ref : (1, nh, tq|tk, hs)   (Q is pre-scaled by 1/sqrt(d_k))
    wo_ref            : (H, H)               output projection weight
    bo_ref            : (1, H)
    o_ref             : (1, tq, H)
    scratch           : m (nh,tq,1), l (nh,tq,1), acc (nh,tq,hs) — all f32
    """
    i = pl.program_id(1)                      # q tile index
    j = pl.program_id(2)                      # k tile index
    tq = q_ref.shape[2]
    tk = k_ref.shape[2]

    @pl.when(j == 0)
    def _init():
        m_scr[...] = jnp.full(m_scr.shape, -jnp.inf, jnp.float32)
        l_scr[...] = jnp.zeros(l_scr.shape, jnp.float32)
        acc_scr[...] = jnp.zeros(acc_scr.shape, jnp.float32)

    def _accumulate(s):
        # Online softmax (all statistics kept in f32).
        m_prev = m_scr[...]                                   # (nh, tq, 1)
        m_new = jnp.maximum(m_prev, jnp.max(s, axis=-1, keepdims=True))
        alpha = jnp.exp(m_prev - m_new)
        p = jnp.exp(s - m_new)                                # (nh, tq, tk)
        l_scr[...] = alpha * l_scr[...] + jnp.sum(p, axis=-1, keepdims=True)
        acc_scr[...] = alpha * acc_scr[...] + jnp.einsum(
            'hqk,hkd->hqd', p.astype(v_ref.dtype), v_ref[0],
            preferred_element_type=jnp.float32)               # (nh, tq, hs)
        m_scr[...] = m_new

    # Off-diagonal visible blocks (j < i): fully unmasked update — no iota /
    # compare / select work on the VALU.
    @pl.when(j < i)
    def _off_diag():
        s = jnp.einsum('hqd,hkd->hqk', q_ref[0], k_ref[0],
                       preferred_element_type=jnp.float32)    # (nh, tq, tk)
        _accumulate(s)

    # Diagonal block (j == i): causal mask from LOCAL indices (valid because
    # tq == tk, asserted in the wrapper).
    @pl.when(j == i)
    def _diag():
        s = jnp.einsum('hqd,hkd->hqk', q_ref[0], k_ref[0],
                       preferred_element_type=jnp.float32)
        row = jax.lax.broadcasted_iota(jnp.int32, (tq, tk), 0)
        col = jax.lax.broadcasted_iota(jnp.int32, (tq, tk), 1)
        s = jnp.where((col > row)[None, :, :], -jnp.inf, s)
        _accumulate(s)

    # j > i blocks are causally dead: no compute here, and no DMA either
    # because the K/V index_maps clamp the block index with jnp.minimum(j, i).

    @pl.when(j == pl.num_programs(2) - 1)
    def _finalize():
        inv_l = pl.reciprocal(l_scr[...], approx=approx_reciprocal)
        z = acc_scr[...] * inv_l                              # (nh, tq, hs) f32
        nh, tq_, hs = z.shape
        # Merge heads, then ONE (tq, H) @ (H, H) matmul: contraction depth K=H
        # fills the MXU instead of nh serial K=hs mini-matmuls.
        z2 = jnp.swapaxes(z, 0, 1).reshape(tq_, nh * hs)      # (tq, H)
        out = jnp.dot(z2.astype(wo_ref.dtype), wo_ref[...],
                      preferred_element_type=jnp.float32)
        out = out + bo_ref[...]
        o_ref[0] = out.astype(o_ref.dtype)                    # lane-dense (tq, H)


# --------------------------------------------------------------------------
# Wrapper
# --------------------------------------------------------------------------
def _pick_seq_tile(S: int, target: int = 256) -> int:
    """Largest divisor of S that is <= target and a multiple of 8 (sublane)."""
    if S <= target:
        return S
    for t in range(target, 7, -1):
        if S % t == 0 and t % 8 == 0:
            return t
    # TODO(synk): pad S to a multiple of 128/256 and mask in-kernel instead of
    # falling back to a single full-sequence tile.
    return S


def _vmem_limit_bytes() -> int:
    """Generation-aware scoped-VMEM limit: ~3/4 of physical, capped at 96 MiB
    (=> ~96 MiB on v5e/v6e with 128 MiB VMEM, ~48 MiB on v7x with 64 MiB)."""
    try:
        cap = pltpu.get_tpu_info().vmem_capacity_bytes
    except Exception:
        cap = 64 * 1024 * 1024
    return max(32 * 1024 * 1024, min(cap * 3 // 4, 96 * 1024 * 1024))


def gpt2_attention(x, w_qkv, b_qkv, w_o, b_o, *, num_heads: int,
                   use_bf16: bool = True, seq_tile=None):
    """GPT-2 causal multi-head attention forward (eval mode).

    x: (B, S, H).  Weights pre-transposed to (in, out); biases (1, out).
    use_bf16: run MXU matmuls with bf16 operands (f32 accumulation); softmax
              statistics / accumulators / bias adds stay f32.
    """
    B, S, H = x.shape
    assert H % num_heads == 0
    hs = H // num_heads
    out_dtype = x.dtype
    compute_dtype = jnp.bfloat16 if use_bf16 else jnp.float32

    tile = seq_tile if seq_tile is not None else _pick_seq_tile(S)
    assert S % tile == 0
    n_tiles = S // tile
    # Causal block skipping + the local diagonal mask both assume tq == tk.
    tq, tk = tile, tile
    assert tq == tk

    xc = x.astype(compute_dtype)
    wqkv_c = w_qkv.astype(compute_dtype)
    wo_c = w_o.astype(compute_dtype)            # (H, H): single fused out-proj matmul
    bqkv_f = b_qkv.astype(jnp.float32)
    bo_f = b_o.astype(jnp.float32)

    vmem_limit = _vmem_limit_bytes()

    def cparams(sem):
        return pltpu.CompilerParams(dimension_semantics=sem,
                                    vmem_limit_bytes=vmem_limit)

    # NOTE: W_QKV / W_O / biases have constant index_maps; on v7x (64 MiB VMEM)
    # pipeline_mode=pl.Buffered(1) on those specs halves their resident VMEM.
    # Left at the default here for portability across jax versions.

    # --- 1) fused QKV projection -> head-major Q/K/V -----------------------
    qkv_kernel = functools.partial(_qkv_proj_kernel,
                                   num_heads=num_heads, head_size=hs)
    qkv_shape = jax.ShapeDtypeStruct((B, num_heads, S, hs), compute_dtype)
    head_block = (1, num_heads, tile, hs)
    q, k, v = pl.pallas_call(
        qkv_kernel,
        out_shape=(qkv_shape, qkv_shape, qkv_shape),
        grid=(B, n_tiles),
        in_specs=[
            pl.BlockSpec((1, tile, H), lambda b, s: (b, s, 0)),     # x
            pl.BlockSpec((H, 3 * H), lambda b, s: (0, 0)),          # W_QKV
            pl.BlockSpec((1, 3 * H), lambda b, s: (0, 0)),          # b_QKV
        ],
        out_specs=(
            pl.BlockSpec(head_block, lambda b, s: (b, 0, s, 0)),
            pl.BlockSpec(head_block, lambda b, s: (b, 0, s, 0)),
            pl.BlockSpec(head_block, lambda b, s: (b, 0, s, 0)),
        ),
        compiler_params=cparams(("parallel", "parallel")),
    )(xc, wqkv_c, bqkv_f)

    # --- 2) flash attention + fused output projection ----------------------
    attn_kernel = functools.partial(_flash_attn_kernel,
                                    approx_reciprocal=use_bf16)

    # Clamp the K/V block index to min(j, i): once j > i the index stops
    # changing, so Pallas elides the prefetch for every causally-dead step
    # (~50% of K/V HBM traffic eliminated), not just the compute.
    kv_map = lambda b, i, j: (b, 0, jnp.minimum(j, i), 0)

    out = pl.pallas_call(
        attn_kernel,
        out_shape=jax.ShapeDtypeStruct((B, S, H), out_dtype),
        grid=(B, n_tiles, n_tiles),
        in_specs=[
            pl.BlockSpec(head_block, lambda b, i, j: (b, 0, i, 0)),   # Q (q tile)
            pl.BlockSpec(head_block, kv_map),                         # K (k tile, clamped)
            pl.BlockSpec(head_block, kv_map),                         # V (k tile, clamped)
            pl.BlockSpec((H, H), lambda b, i, j: (0, 0)),             # W_O
            pl.BlockSpec((1, H), lambda b, i, j: (0, 0)),             # b_O
        ],
        out_specs=pl.BlockSpec((1, tile, H), lambda b, i, j: (b, i, 0)),
        scratch_shapes=[
            pltpu.VMEM((num_heads, tile, 1), jnp.float32),    # running row max
            pltpu.VMEM((num_heads, tile, 1), jnp.float32),    # running row sum
            pltpu.VMEM((num_heads, tile, hs), jnp.float32),   # weighted-V acc
        ],
        compiler_params=cparams(("parallel", "parallel", "arbitrary")),
    )(q, k, v, wo_c, bo_f)
    return out


# --------------------------------------------------------------------------
# Pure-JAX reference mirroring the PyTorch forward exactly
# --------------------------------------------------------------------------
def _reference(x, w_qkv, b_qkv, w_o, b_o, num_heads):
    B, S, H = x.shape
    hs = H // num_heads
    qkv = x @ w_qkv + b_qkv[0]
    Q, K, V = jnp.split(qkv, 3, axis=2)
    Q = Q.reshape(B, S, num_heads, hs)
    K = K.reshape(B, S, num_heads, hs)
    V = V.reshape(B, S, num_heads, hs)
    tri = jnp.triu(jnp.ones((S, S), dtype=bool), k=1)
    qk = jnp.einsum('abcd,aecd->acbe', Q, K)
    qk = jnp.where(tri, -jnp.inf, qk) / jnp.sqrt(jnp.float32(hs))
    a = jax.nn.softmax(qk, axis=3)
    res = jnp.einsum('abcd,adbe->acbe', a, V)
    Z = res.reshape(B, S, H)
    return Z @ w_o + b_o[0]


if __name__ == "__main__":
    # Small config consistent with the module: hidden=32, heads=4, seq=8, batch=2.
    B, S, H, NUM_HEADS = 2, 8, 32, 4

    key = jax.random.PRNGKey(0)
    kx, k1, k2, k3, k4 = jax.random.split(key, 5)

    x = jax.random.normal(kx, (B, S, H), dtype=jnp.float32)

    bound = 1.0 / jnp.sqrt(jnp.float32(H))
    w_qkv = jax.random.uniform(k1, (H, 3 * H), jnp.float32, -bound, bound)
    b_qkv = jax.random.uniform(k2, (1, 3 * H), jnp.float32, -bound, bound)
    w_o = jax.random.uniform(k3, (H, H), jnp.float32, -bound, bound)
    b_o = jax.random.uniform(k4, (1, H), jnp.float32, -bound, bound)

    ref = _reference(x, w_qkv, b_qkv, w_o, b_o, NUM_HEADS)

    # Strict check: f32 operands, exact reciprocal.
    out_f32 = jax.block_until_ready(
        gpt2_attention(x, w_qkv, b_qkv, w_o, b_o,
                       num_heads=NUM_HEADS, use_bf16=False))
    assert out_f32.shape == (B, S, H)
    assert jnp.allclose(out_f32, ref, atol=1e-4, rtol=1e-4), "f32 mismatch"

    # Fast path: bf16 MXU operands + approx reciprocal (looser tolerance).
    out_bf16 = jax.block_until_ready(
        gpt2_attention(x, w_qkv, b_qkv, w_o, b_o,
                       num_heads=NUM_HEADS, use_bf16=True))
    assert out_bf16.shape == (B, S, H)
    assert jnp.allclose(out_bf16, ref, atol=5e-2, rtol=5e-2), "bf16 mismatch"

    print("KERNEL_OK")
</pallas_src>

<mosaic_0001>
module attributes {stable_mosaic.version = 11 : i64} {
  func.func @_qkv_proj_kernel(%arg0: i32, %arg1: i32, %arg2: memref<1x8x32xf32, #tpu.memory_space<vmem>>, %arg3: memref<32x96xf32, #tpu.memory_space<vmem>>, %arg4: memref<1x96xf32, #tpu.memory_space<vmem>>, %arg5: memref<1x4x8x8xf32, #tpu.memory_space<vmem>>, %arg6: memref<1x4x8x8xf32, #tpu.memory_space<vmem>>, %arg7: memref<1x4x8x8xf32, #tpu.memory_space<vmem>>) attributes {dimension_semantics = [#tpu.dimension_semantics<parallel>, #tpu.dimension_semantics<parallel>], iteration_bounds = array<i64: 2, 1>, scalar_prefetch = 0 : i64, scratch_operands = 0 : i64, tpu.core_type = #tpu.core_type<tc>, window_params = [{transform_indices = @transform_0, window_bounds = array<i64: 1, 8, 32>}, {pipeline_mode = #tpu.pipeline_mode<synchronous>, transform_indices = @transform_1, window_bounds = array<i64: 32, 96>}, {pipeline_mode = #tpu.pipeline_mode<synchronous>, transform_indices = @transform_2, window_bounds = array<i64: 1, 96>}, {transform_indices = @transform_3, window_bounds = array<i64: 1, 4, 8, 8>}, {transform_indices = @transform_4, window_bounds = array<i64: 1, 4, 8, 8>}, {transform_indices = @transform_5, window_bounds = array<i64: 1, 4, 8, 8>}]} {
    %c0 = arith.constant 0 : index
    %c0_0 = arith.constant 0 : index
    %c0_1 = arith.constant 0 : index
    %0 = vector.load %arg2[%c0, %c0_0, %c0_1] : memref<1x8x32xf32, #tpu.memory_space<vmem>>, vector<1x8x32xf32>
    %1 = vector.shape_cast %0 : vector<1x8x32xf32> to vector<8x32xf32>
    %c0_2 = arith.constant 0 : index
    %c0_3 = arith.constant 0 : index
    %2 = vector.load %arg3[%c0_2, %c0_3] : memref<32x96xf32, #tpu.memory_space<vmem>>, vector<32x96xf32>
    %cst = arith.constant dense<0.000000e+00> : vector<8x96xf32>
    %3 = tpu.matmul %1, %2, %cst {dimension_numbers = #tpu.dot_dimension_numbers<[1], [0], [0], [1], [0, 0, 1, 1], [], []>} : vector<8x32xf32>, vector<32x96xf32>, vector<8x96xf32> -> vector<8x96xf32>
    %c0_4 = arith.constant 0 : index
    %c0_5 = arith.constant 0 : index
    %4 = vector.load %arg4[%c0_4, %c0_5] : memref<1x96xf32, #tpu.memory_space<vmem>>, vector<1x96xf32>
    %5 = vector.broadcast %4 : vector<1x96xf32> to vector<8x96xf32>
    %6 = arith.addf %3, %5 : vector<8x96xf32>
    %7 = vector.extract_strided_slice %6 {offsets = [0, 0], sizes = [8, 32], strides = [1, 1]} : vector<8x96xf32> to vector<8x32xf32>
    %cst_6 = arith.constant 0.353553385 : f32
    %8 = vector.broadcast %cst_6 : f32 to vector<8x32xf32>
    %9 = arith.mulf %7, %8 : vector<8x32xf32>
    %10 = vector.shape_cast %9 : vector<8x32xf32> to vector<8x4x8xf32>
    %11 = tpu.transpose %10, [1, 0, 2] : vector<8x4x8xf32> -> vector<4x8x8xf32>
    %c0_7 = arith.constant 0 : index
    %c0_8 = arith.constant 0 : index
    %c0_9 = arith.constant 0 : index
    %c0_10 = arith.constant 0 : index
    %12 = vector.load %arg5[%c0_7, %c0_8, %c0_9, %c0_10] : memref<1x4x8x8xf32, #tpu.memory_space<vmem>>, vector<1x4x8x8xf32>
    %13 = vector.shape_cast %12 : vector<1x4x8x8xf32> to vector<4x8x8xf32>
    %14 = vector.shape_cast %11 : vector<4x8x8xf32> to vector<1x4x8x8xf32>
    tpu.vector_store %arg5[%c0_7, %c0_8, %c0_9, %c0_10], %14 {strides = array<i32>} : memref<1x4x8x8xf32, #tpu.memory_space<vmem>>, vector<1x4x8x8xf32>,
    %15 = vector.extract_strided_slice %6 {offsets = [0, 32], sizes = [8, 32], strides = [1, 1]} : vector<8x96xf32> to vector<8x32xf32>
    %16 = vector.shape_cast %15 : vector<8x32xf32> to vector<8x4x8xf32>
    %17 = tpu.transpose %16, [1, 0, 2] : vector<8x4x8xf32> -> vector<4x8x8xf32>
    %c0_11 = arith.constant 0 : index
    %c0_12 = arith.constant 0 : index
    %c0_13 = arith.constant 0 : index
    %c0_14 = arith.constant 0 : index
    %18 = vector.load %arg6[%c0_11, %c0_12, %c0_13, %c0_14] : memref<1x4x8x8xf32, #tpu.memory_space<vmem>>, vector<1x4x8x8xf32>
    %19 = vector.shape_cast %18 : vector<1x4x8x8xf32> to vector<4x8x8xf32>
    %20 = vector.shape_cast %17 : vector<4x8x8xf32> to vector<1x4x8x8xf32>
    tpu.vector_store %arg6[%c0_11, %c0_12, %c0_13, %c0_14], %20 {strides = array<i32>} : memref<1x4x8x8xf32, #tpu.memory_space<vmem>>, vector<1x4x8x8xf32>,
    %21 = vector.extract_strided_slice %6 {offsets = [0, 64], sizes = [8, 32], strides = [1, 1]} : vector<8x96xf32> to vector<8x32xf32>
    %22 = vector.shape_cast %21 : vector<8x32xf32> to vector<8x4x8xf32>
    %23 = tpu.transpose %22, [1, 0, 2] : vector<8x4x8xf32> -> vector<4x8x8xf32>
    %c0_15 = arith.constant 0 : index
    %c0_16 = arith.constant 0 : index
    %c0_17 = arith.constant 0 : index
    %c0_18 = arith.constant 0 : index
    %24 = vector.load %arg7[%c0_15, %c0_16, %c0_17, %c0_18] : memref<1x4x8x8xf32, #tpu.memory_space<vmem>>, vector<1x4x8x8xf32>
    %25 = vector.shape_cast %24 : vector<1x4x8x8xf32> to vector<4x8x8xf32>
    %26 = vector.shape_cast %23 : vector<4x8x8xf32> to vector<1x4x8x8xf32>
    tpu.vector_store %arg7[%c0_15, %c0_16, %c0_17, %c0_18], %26 {strides = array<i32>} : memref<1x4x8x8xf32, #tpu.memory_space<vmem>>, vector<1x4x8x8xf32>,
    return
  }
  func.func @transform_0(%arg0: i32, %arg1: i32) -> (i32, i32, i32) {
    %c0_i32 = arith.constant 0 : i32
    %c0_i32_0 = arith.constant 0 : i32
    return %arg0, %arg1, %c0_i32 : i32, i32, i32
  }
  func.func @transform_1(%arg0: i32, %arg1: i32) -> (i32, i32) {
    %c0_i32 = arith.constant 0 : i32
    %c0_i32_0 = arith.constant 0 : i32
    %c0_i32_1 = arith.constant 0 : i32
    return %c0_i32, %c0_i32_0 : i32, i32
  }
  func.func @transform_2(%arg0: i32, %arg1: i32) -> (i32, i32) {
    %c0_i32 = arith.constant 0 : i32
    %c0_i32_0 = arith.constant 0 : i32
    %c0_i32_1 = arith.constant 0 : i32
    return %c0_i32, %c0_i32_0 : i32, i32
  }
  func.func @transform_3(%arg0: i32, %arg1: i32) -> (i32, i32, i32, i32) {
    %c0_i32 = arith.constant 0 : i32
    %c0_i32_0 = arith.constant 0 : i32
    %c0_i32_1 = arith.constant 0 : i32
    return %arg0, %c0_i32, %arg1, %c0_i32_0 : i32, i32, i32, i32
  }
  func.func @transform_4(%arg0: i32, %arg1: i32) -> (i32, i32, i32, i32) {
    %c0_i32 = arith.constant 0 : i32
    %c0_i32_0 = arith.constant 0 : i32
    %c0_i32_1 = arith.constant 0 : i32
    return %arg0, %c0_i32, %arg1, %c0_i32_0 : i32, i32, i32, i32
  }
  func.func @transform_5(%arg0: i32, %arg1: i32) -> (i32, i32, i32, i32) {
    %c0_i32 = arith.constant 0 : i32
    %c0_i32_0 = arith.constant 0 : i32
    %c0_i32_1 = arith.constant 0 : i32
    return %arg0, %c0_i32, %arg1, %c0_i32_0 : i32, i32, i32, i32
  }
}

</mosaic_0001>

<llo_original>
// kernel: tpu_custom_call.1
$region0: #{tpu_custom_call.1}
  #allocation0 [shape = 'u32[]', space=smem, size = 0x4, offset = 0x4, fixed_abs, tag = 'smem constant byte address 0x4 - core index']
  #allocation1 [shape = 'u32[144,128]{1,0:T(1,128)}', space=vmem, size = 0x12000, scoped, tag = 'internal scratch']
  %s0 = inlined_call_operand.hbm [shape: f32[2,8,32], index: 0, kind: input, shape index: {}]
  %s1 = inlined_call_operand.hbm [shape: f32[32,96], index: 1, kind: input, shape index: {}]
  %s2 = inlined_call_operand.vmem [shape: f32[1,96], index: 2, kind: input, shape index: {}]
  %s3 = inlined_call_operand.hbm [shape: f32[2,4,8,8], index: 3, kind: output, shape index: {0}]
  %s4 = inlined_call_operand.hbm [shape: f32[2,4,8,8], index: 4, kind: output, shape index: {1}]
  %s5 = inlined_call_operand.hbm [shape: f32[2,4,8,8], index: 5, kind: output, shape index: {2}]
  %6 = xla_tuple %s3, %s4, %s5
  %s7 = sld [smem:[#allocation0]]
  $region69: #{tpu_custom_call.1} parent=0
    _
  %s9 = ssub.s32 1, %s7
  %s10 = scalar_select 0, %s9, %s7
  $region1: #{tpu_custom_call.1} parent=0
    #allocation2 [shape = 'u8[8192]{0}', space=vmem, size = 0x2000, scoped, tag = 'input window, operand 0']
    #allocation3 [shape = 's32[2]{0}', space=sflag, size = 0x8, scoped, tag = 'scoped memory for tpu_custom_call.1']
    #allocation4 [shape = 's32[2]{0}', space=sflag, size = 0x8, scoped, tag = 'scoped memory for tpu_custom_call.1']
    #allocation5 [shape = 'u8[16384]{0}', space=vmem, size = 0x4000, scoped, tag = 'input window, operand 1, single buffered']
    #allocation6 [shape = 's32[1]{0}', space=sflag, size = 0x4, scoped, tag = 'scoped memory for tpu_custom_call.1']
    #allocation7 [shape = 'u8[32768]{0}', space=vmem, size = 0x8000, scoped, tag = 'output window, operand 0']
    #allocation8 [shape = 'u8[32768]{0}', space=vmem, size = 0x8000, scoped, tag = 'output window, operand 1']
    #allocation9 [shape = 's32[2]{0}', space=sflag, size = 0x8, scoped, tag = 'scoped memory for tpu_custom_call.1']
    #allocation10 [shape = 'u8[32768]{0}', space=vmem, size = 0x8000, scoped, tag = 'output window, operand 2']
    %11 = vsyncpa [#allocation3], 0
    %s12 = scalar_lea.sflag [#allocation3], 1
    %13 = vsyncpa %s12, 0
    %14 = vsyncpa [#allocation6], 0
    %15 = vsyncpa [#allocation4], 0
    %s16 = scalar_lea.sflag [#allocation4], 1
    %17 = vsyncpa %s16, 0
    %18 = vsyncpa [#allocation9], 0
    %s19 = scalar_lea.sflag [#allocation9], 1
    %20 = vsyncpa %s19, 0
    loop: start=0, step=1, limit=4
    $region2: #{tpu_custom_call.1} parent=1 // loop_pre_header
      _
    $region3: #{tpu_custom_call.1} parent=1 // loop_header
      %s22 = sphi 0, %s26
      %p23 = scmp.ge.s32.totalorder %s22, 4
      %s29 = sphi 0, %s41
      %s30 = sphi 0, %s37
      %s31 = sphi 0, %s29
      %s32 = sphi 0, %s30
      %s33 = sphi 0, %s31
      %s34 = sphi 0, %s32
      %s46 = sphi 0, %s48
      %s49 = sphi 0, %s46
      %s50 = sphi 0, %s49
      %s66 = sphi 0, %s50
      %s70 = sphi 0, %s70
      %s72 = sphi 0, %s70
      %s73 = sphi 0, %s72
      %s87 = sphi 0, %s73
      %s91 = sphi 0, %s91
      %s93 = sphi 0, %s91
      %s94 = sphi 0, %s93
      %s108 = sphi 0, %s94
      %s116 = sphi 0, %s118
      %s119 = sphi 0, %s116
      %s120 = sphi 0, %s119
      %s136 = sphi 0, %s120
      %s144 = sphi 0, %s146
      %s147 = sphi 0, %s144
      %s148 = sphi 0, %s147
      %s164 = sphi 0, %s148
      %s172 = sphi 0, %s174
      %s175 = sphi 0, %s172
      %s176 = sphi 0, %s175
      %s192 = sphi 0, %s176
    $region4: #{tpu_custom_call.1} parent=1 // loop_header_branch
      %25 = sbr.rel (%p23) target = $region8
    $region5: #{tpu_custom_call.1} parent=1 // loop_body
      %s27 = ssub.s32 %s22, 1
      %s28 = ssub.s32 %s22, 2
      %s35 = sadd.s32 1, %s30
      %p36 = scmp.ge.s32.totalorder %s35, 1
      %s37 = scalar_select %p36, 0, %s35
      %s38 = sadd.s32 1, %s29
      %s39 = scalar_select %p36, %s38, %s29
      %p40 = scmp.ge.s32.totalorder %s39, 2
      %s41 = scalar_select %p40, 0, %s39
      %s42 = ssub.s32 %s29, %s41
      %s43 = ssub.s32 %s30, %s37
      %s44 = sor.u32 %s42, %s43
      %p45 = scmp.eq.s32.totalorder %s44, 0
      %s47 = sadd.s32 %s46, 1
      %s48 = scalar_select %p45, %s46, %s47
      %p51 = pneg %p45
      %p52 = scmp.eq.s32.totalorder %s22, 1
      %p53 = por %p51, %p52
      %p54 = scmp.ne.s32.totalorder %s46, %s49
      %p55 = scmp.eq.s32.totalorder %s22, 0
      %p56 = por %p54, %p55
      %p57 = scmp.ne.s32.totalorder %s46, %s49
      %p58 = scmp.eq.s32.totalorder %s27, 1
      %p59 = por %p57, %p58
      %p60 = scmp.ne.s32.totalorder %s49, %s50
      %p61 = scmp.eq.s32.totalorder %s27, 0
      %p62 = por %p60, %p61
      %p63 = scmp.ne.s32.totalorder %s49, %s50
      %p64 = scmp.eq.s32.totalorder %s28, 1
      %p65 = por %p63, %p64
      %p67 = scmp.ne.s32.totalorder %s50, %s66
      %p68 = scmp.eq.s32.totalorder %s28, 0
      %p69 = por %p67, %p68
      %s71 = sadd.s32 %s70, 1
      %p74 = scmp.eq.s32.totalorder %s22, 1
      %p75 = scmp.ne.s32.totalorder %s70, %s72
      %p76 = scmp.eq.s32.totalorder %s22, 0
      %p77 = por %p75, %p76
      %p78 = scmp.ne.s32.totalorder %s70, %s72
      %p79 = scmp.eq.s32.totalorder %s27, 1
      %p80 = por %p78, %p79
      %p81 = scmp.ne.s32.totalorder %s72, %s73
      %p82 = scmp.eq.s32.totalorder %s27, 0
      %p83 = por %p81, %p82
      %p84 = scmp.ne.s32.totalorder %s72, %s73
      %p85 = scmp.eq.s32.totalorder %s28, 1
      %p86 = por %p84, %p85
      %p88 = scmp.ne.s32.totalorder %s73, %s87
      %p89 = scmp.eq.s32.totalorder %s28, 0
      %p90 = por %p88, %p89
      %s92 = sadd.s32 %s91, 1
      %p95 = scmp.eq.s32.totalorder %s22, 1
      %p96 = scmp.ne.s32.totalorder %s91, %s93
      %p97 = scmp.eq.s32.totalorder %s22, 0
      %p98 = por %p96, %p97
      %p99 = scmp.ne.s32.totalorder %s91, %s93
      %p100 = scmp.eq.s32.totalorder %s27, 1
      %p101 = por %p99, %p100
      %p102 = scmp.ne.s32.totalorder %s93, %s94
      %p103 = scmp.eq.s32.totalorder %s27, 0
      %p104 = por %p102, %p103
      %p105 = scmp.ne.s32.totalorder %s93, %s94
      %p106 = scmp.eq.s32.totalorder %s28, 1
      %p107 = por %p105, %p106
      %p109 = scmp.ne.s32.totalorder %s94, %s108
      %p110 = scmp.eq.s32.totalorder %s28, 0
      %p111 = por %p109, %p110
      %s112 = ssub.s32 %s29, %s41
      %s113 = ssub.s32 %s30, %s37
      %s114 = sor.u32 %s112, %s113
      %p115 = scmp.eq.s32.totalorder %s114, 0
      %s117 = sadd.s32 %s116, 1
      %s118 = scalar_select %p115, %s116, %s117
      %p121 = pneg %p115
      %p122 = scmp.eq.s32.totalorder %s22, 1
      %p123 = por %p121, %p122
      %p124 = scmp.ne.s32.totalorder %s116, %s119
      %p125 = scmp.eq.s32.totalorder %s22, 0
      %p126 = por %p124, %p125
      %p127 = scmp.ne.s32.totalorder %s116, %s119
      %p128 = scmp.eq.s32.totalorder %s27, 1
      %p129 = por %p127, %p128
      %p130 = scmp.ne.s32.totalorder %s119, %s120
      %p131 = scmp.eq.s32.totalorder %s27, 0
      %p132 = por %p130, %p131
      %p133 = scmp.ne.s32.totalorder %s119, %s120
      %p134 = scmp.eq.s32.totalorder %s28, 1
      %p135 = por %p133, %p134
      %p137 = scmp.ne.s32.totalorder %s120, %s136
      %p138 = scmp.eq.s32.totalorder %s28, 0
      %p139 = por %p137, %p138
      %s140 = ssub.s32 %s29, %s41
      %s141 = ssub.s32 %s30, %s37
      %s142 = sor.u32 %s140, %s141
      %p143 = scmp.eq.s32.totalorder %s142, 0
      %s145 = sadd.s32 %s144, 1
      %s146 = scalar_select %p143, %s144, %s145
      %p149 = pneg %p143
      %p150 = scmp.eq.s32.totalorder %s22, 1
      %p151 = por %p149, %p150
      %p152 = scmp.ne.s32.totalorder %s144, %s147
      %p153 = scmp.eq.s32.totalorder %s22, 0
      %p154 = por %p152, %p153
      %p155 = scmp.ne.s32.totalorder %s144, %s147
      %p156 = scmp.eq.s32.totalorder %s27, 1
      %p157 = por %p155, %p156
      %p158 = scmp.ne.s32.totalorder %s147, %s148
      %p159 = scmp.eq.s32.totalorder %s27, 0
      %p160 = por %p158, %p159
      %p161 = scmp.ne.s32.totalorder %s147, %s148
      %p162 = scmp.eq.s32.totalorder %s28, 1
      %p163 = por %p161, %p162
      %p165 = scmp.ne.s32.totalorder %s148, %s164
      %p166 = scmp.eq.s32.totalorder %s28, 0
      %p167 = por %p165, %p166
      %s168 = ssub.s32 %s29, %s41
      %s169 = ssub.s32 %s30, %s37
      %s170 = sor.u32 %s168, %s169
      %p171 = scmp.eq.s32.totalorder %s170, 0
      %s173 = sadd.s32 %s172, 1
      %s174 = scalar_select %p171, %s172, %s173
      %p177 = pneg %p171
      %p178 = scmp.eq.s32.totalorder %s22, 1
      %p179 = por %p177, %p178
      %p180 = scmp.ne.s32.totalorder %s172, %s175
      %p181 = scmp.eq.s32.totalorder %s22, 0
      %p182 = por %p180, %p181
      %p183 = scmp.ne.s32.totalorder %s172, %s175
      %p184 = scmp.eq.s32.totalorder %s27, 1
      %p185 = por %p183, %p184
      %p186 = scmp.ne.s32.totalorder %s175, %s176
      %p187 = scmp.eq.s32.totalorder %s27, 0
      %p188 = por %p186, %p187
      %p189 = scmp.ne.s32.totalorder %s175, %s176
      %p190 = scmp.eq.s32.totalorder %s28, 1
      %p191 = por %p189, %p190
      %p193 = scmp.ne.s32.totalorder %s176, %s192
      %p194 = scmp.eq.s32.totalorder %s28, 0
      %p195 = por %p193, %p194
      %p196 = scmp.le.s32.totalorder 1, %s22
      %p197 = scmp.lt.s32.totalorder %s22, 3
      %p198 = pnand %p196, %p197
      %p199 = pneg %p198
      // Predicated region
      $region9: #{tpu_custom_call.1} parent=5 // pred_check
        _
      $region10: #{tpu_custom_call.1} parent=5 // pred_check_branch
        %201 = sbr.rel (%p198) target = $region12
      $region11: #{tpu_custom_call.1} parent=5 // pred_region
        %s202 = ssub.s32 %s22, 1
        // Predicated region
        $region13: #{tpu_custom_call.1} parent=11 // pred_check
          %p203 = pneg %p83
        $region14: #{tpu_custom_call.1} parent=11 // pred_check_branch
          %205 = sbr.rel (%p203) target = $region16
        $region15: #{tpu_custom_call.1} parent=11 // pred_region
          %s207 = ssub.s32 512, 512
          %208 = vsyncadd [#allocation6], %s207
          %s209 = sshll.u32 [#allocation5], 4
          %s210 = int_to_ptr.vmem [resolvable:$true] %s209
          %215 = dma.hbm_to_vmem [thread:$0]  %s1, 512, %s210, [#allocation6], 128, 128, 8
        $region16: #{tpu_custom_call.1} parent=11 // pred_fallthru
          _
        // Predicated region
        $region17: #{tpu_custom_call.1} parent=11 // pred_check
          %p216 = pneg %p104
        $region18: #{tpu_custom_call.1} parent=11 // pred_check_branch
          %218 = sbr.rel (%p216) target = $region20
        $region19: #{tpu_custom_call.1} parent=11 // pred_region
          _
        $region20: #{tpu_custom_call.1} parent=11 // pred_fallthru
          _
      $region12: #{tpu_custom_call.1} parent=5 // pred_fallthru
        _
      %p219 = scmp.lt.s32.totalorder %s22, 2
      // Predicated region
      $region21: #{tpu_custom_call.1} parent=5 // pred_check
        %p220 = pneg %p219
      $region22: #{tpu_custom_call.1} parent=5 // pred_check_branch
        %222 = sbr.rel (%p220) target = $region24
      $region23: #{tpu_custom_call.1} parent=5 // pred_region
        // Predicated region
        $region25: #{tpu_custom_call.1} parent=23 // pred_check
          %p223 = pneg %p56
        $region26: #{tpu_custom_call.1} parent=23 // pred_check_branch
          %225 = sbr.rel (%p223) target = $region28
        $region27: #{tpu_custom_call.1} parent=23 // pred_region
          %s226 = sand.u32 %s46, 1
          %s227 = scalar_lea.sflag [#allocation3], %s226
          %s228 = sand.u32 %s46, 1
          %s229 = smul.addr %s228, 8
          %s230 = scalar_lea.vmem [#allocation2], %s229
          %s232 = ssub.s32 128, 128
          %233 = vsyncadd %s227, %s232
          %s234 = sadd.s32 %s30, %s29
          %s235 = smul.addr %s234, 128
          %s236 = scalar_lea.hbm %s0, %s235
          %s238 = sshll.u32 %s230, 4
          %s239 = int_to_ptr.vmem [resolvable:$true] %s238
          %241 = dma.hbm_to_vmem [thread:$0]  %s236, 128, %s239, %s227
        $region28: #{tpu_custom_call.1} parent=23 // pred_fallthru
          _
      $region24: #{tpu_custom_call.1} parent=5 // pred_fallthru
        _
      %p242 = scmp.le.s32.totalorder 1, %s22
      %p243 = scmp.lt.s32.totalorder %s22, 3
      %p244 = pnand %p242, %p243
      %p245 = pneg %p244
      // Predicated region
      $region29: #{tpu_custom_call.1} parent=5 // pred_check
        _
      $region30: #{tpu_custom_call.1} parent=5 // pred_check_branch
        %247 = sbr.rel (%p244) target = $region32
      $region31: #{tpu_custom_call.1} parent=5 // pred_region
        %s248 = ssub.s32 %s22, 1
        %s249 = sand.u32 %s49, 1
        %s250 = scalar_lea.sflag [#allocation3], %s249
        %s251 = sand.u32 %s49, 1
        %s252 = smul.addr %s251, 8
        %s253 = scalar_lea.vmem [#allocation2], %s252
        // Predicated region
        $region33: #{tpu_custom_call.1} parent=31 // pred_check
          %p254 = pneg %p62
        $region34: #{tpu_custom_call.1} parent=31 // pred_check_branch
          %256 = sbr.rel (%p254) target = $region36
        $region35: #{tpu_custom_call.1} parent=31 // pred_region
          %257 = dma.done %s250, 128
        $region36: #{tpu_custom_call.1} parent=31 // pred_fallthru
          _
        // Predicated region
        $region37: #{tpu_custom_call.1} parent=31 // pred_check
          %p258 = pneg %p83
        $region38: #{tpu_custom_call.1} parent=31 // pred_check_branch
          %260 = sbr.rel (%p258) target = $region40
        $region39: #{tpu_custom_call.1} parent=31 // pred_region
          %261 = dma.done [#allocation6], 512
        $region40: #{tpu_custom_call.1} parent=31 // pred_fallthru
          _
        %s262 = sand.u32 %s49, 1
        %s263 = scalar_lea.sflag [#allocation3], %s262
        %s264 = sand.u32 %s49, 1
        %s265 = smul.addr %s264, 8
        %s266 = scalar_lea.vmem [#allocation2], %s265
        %p267 = pneg %p62
        %p268 = pneg %p59
        %p269 = pneg %p83
        %p270 = pneg %p80
        %p271 = pneg %p104
        %p272 = pneg %p101
        %p273 = pneg %p132
        %p274 = pneg %p129
        %s275 = sand.u32 %s119, 1
        %s276 = scalar_lea.sflag [#allocation4], %s275
        %s277 = sand.u32 %s119, 1
        %s278 = smul.addr %s277, 32
        %s279 = scalar_lea.vmem [#allocation7], %s278
        %p280 = pneg %p160
        %p281 = pneg %p157
        %s282 = sand.u32 %s27, 1
        %s283 = scalar_lea.sflag [#allocation9], %s282
        %s284 = sand.u32 %s147, 1
        %s285 = smul.addr %s284, 32
        %s286 = scalar_lea.vmem [#allocation8], %s285
        %p287 = pneg %p188
        %p288 = pneg %p185
        %s289 = sand.u32 %s27, 1
        %s290 = scalar_lea.sflag [#allocation9], %s289
        %s291 = sand.u32 %s175, 1
        %s292 = smul.addr %s291, 32
        %s293 = scalar_lea.vmem [#allocation10], %s292
        %v294 = vld [vmem:[%s253] sm:$0xff]
        %v295 = vld [vmem:[#allocation5] sm:$0xff]
        %v296 = vld [vmem:[#allocation5 + $0x8] sm:$0xff]
        %v297 = vld [vmem:[#allocation5 + $0x10] sm:$0xff]
        %v298 = vld [vmem:[#allocation5 + $0x18] sm:$0xff]
        %v299 = vld [vmem:[%s2] sm:$0x1]
        %v301 = vlaneseq
        %v302 = vshrl.u32 %v301, 7
        %v303 = vsub.s32 0, %v302
        %v304 = vrot.slane %v299, %v303
        %vm306 = vcmask 261120
        %v308 = vsel %vm306, %v294, 0
        %310 = vmatprep.subr.mxu0 0.0
        %311 = vmatpush1.msra.mxu0 %v295
        %312 = vmatprep.subr.mxu0 0.0
        %313 = vmatpush1.msra.mxu0 %v296
        %314 = vmatprep.subr.mxu0 0.0
        %315 = vmatpush1.msra.mxu0 %v297
        %316 = vmatprep.subr.mxu0 0.0
        %317 = vmatpush1.msra.mxu0 %v298
        %318 = vmatprep.subr.mxu0 0.0
        %319 = vmatpush1.msra.mxu0 0.0
        %320 = vmatprep.subr.mxu0 0.0
        %321 = vmatpush1.msra.mxu0 0.0
        %322 = vmatprep.subr.mxu0 0.0
        %323 = vmatpush1.msra.mxu0 0.0
        %324 = vmatprep.subr.mxu0 0.0
        %325 = vmatpush1.msra.mxu0 0.0
        %326 = vmatprep.subr.mxu0 0.0
        %327 = vmatpush1.msra.mxu0 0.0
        %328 = vmatprep.subr.mxu0 0.0
        %329 = vmatpush1.msra.mxu0 0.0
        %330 = vmatprep.subr.mxu0 0.0
        %331 = vmatpush1.msra.mxu0 0.0
        %332 = vmatprep.subr.mxu0 0.0
        %333 = vmatpush1.msra.mxu0 0.0
        %334 = vmatprep.subr.mxu0 0.0
        %335 = vmatpush1.msra.mxu0 0.0
        %336 = vmatprep.subr.mxu0 0.0
        %337 = vmatpush1.msra.mxu0 0.0
        %338 = vmatprep.subr.mxu0 0.0
        %339 = vmatpush1.msra.mxu0 0.0
        %340 = vmatprep.subr.mxu0 0.0
        %341 = vmatpush1.msra.mxu0 0.0
        %342 = vmatprep.subr.mxu0 0.0
        %343 = vmatpush1.msra.mxu0 0.0
        %344 = vmatprep.subr.mxu0 0.0
        %345 = vmatpush1.msra.mxu0 0.0
        %346 = vmatprep.subr.mxu0 0.0
        %347 = vmatpush1.msra.mxu0 0.0
        %348 = vmatprep.subr.mxu0 0.0
        %349 = vmatpush1.msra.mxu0 0.0
        %350 = vmatprep.subr.mxu0 0.0
        %351 = vmatpush1.msra.mxu0 0.0
        %352 = vmatprep.subr.mxu0 0.0
        %353 = vmatpush1.msra.mxu0 0.0
        %354 = vmatprep.subr.mxu0 0.0
        %355 = vmatpush1.msra.mxu0 0.0
        %356 = vmatprep.subr.mxu0 0.0
        %357 = vmatpush1.msra.mxu0 0.0
        %358 = vmatprep.subr.mxu0 0.0
        %359 = vmatpush1.msra.mxu0 0.0
        %360 = vmatprep.subr.mxu0 0.0
        %361 = vmatpush1.msra.mxu0 0.0
        %362 = vmatprep.subr.mxu0 0.0
        %363 = vmatpush1.msra.mxu0 0.0
        %364 = vmatprep.subr.mxu0 0.0
        %365 = vmatpush1.msra.mxu0 0.0
        %366 = vmatprep.subr.mxu0 0.0
        %367 = vmatpush1.msra.mxu0 0.0
        %368 = vmatprep.subr.mxu0 0.0
        %369 = vmatpush1.msra.mxu0 0.0
        %370 = vmatprep.subr.mxu0 0.0
        %371 = vmatpush1.msra.mxu0 0.0
        %372 = vmatprep.subr.mxu0 0.0
        %373 = vmatpush1.msra.mxu0 0.0
        %374 = vmatprep.mubr.f32.mxu0 0.0
        %375 = vmatmul.mubr.f32.gmra.mrb[0].mxu0 %v308
        %v376 = vpop.f32.mrb[0].mxu0
        %v377 = vadd.f32 %v304, %v376
        %v378 = vpop.f32.mrb[0].mxu0
        %379 = vdwg.mxu0
        %v380 = vmul.f32 %v377, 0.35355338
        %382 = vrot.lane.b32.xlu0 %v380, 120
        %v383 = vpop.permute.xlu0 %382
        %385 = vrot.lane.b32.xlu0 %v380, 112
        %v386 = vpop.permute.xlu0 %385
        %388 = vrot.lane.b32.xlu0 %v380, 104
        %v389 = vpop.permute.xlu0 %388
        %v391 = vcombine.low %v380, %v386
        %v392 = vcombine.high %v380, %v386
        %v394 = vunpack.c.l.s4 1983009808
        %v395 = vunpack.c.0.s8 %v394
        %v396 = vlaneseq
        %v397 = vshrl.u32 %v396, 7
        %v398 = vsub.s32 %v395, %v397
        %v399 = vrot.slane %v391, %v398
        %v401 = vunpack.c.l.s4 1983009808
        %v402 = vunpack.c.0.s8 %v401
        %v403 = vlaneseq
        %v404 = vshrl.u32 %v403, 7
        %v405 = vsub.s32 %v402, %v404
        %v406 = vrot.slane %v392, %v405
        %v407 = vcombine.low %v383, %v389
        %v408 = vcombine.high %v383, %v389
        %v410 = vunpack.c.l.s4 1983009808
        %v411 = vunpack.c.0.s8 %v410
        %v412 = vlaneseq
        %v413 = vshrl.u32 %v412, 7
        %v414 = vsub.s32 %v411, %v413
        %v415 = vrot.slane %v407, %v414
        %v417 = vunpack.c.l.s4 1983009808
        %v418 = vunpack.c.0.s8 %v417
        %v419 = vlaneseq
        %v420 = vshrl.u32 %v419, 7
        %v421 = vsub.s32 %v418, %v420
        %v422 = vrot.slane %v408, %v421
        %v423 = vcombine.low %v399, %v415
        %v424 = vcombine.high %v399, %v415
        %v426 = vunpack.c.l.s4 1934713408
        %v427 = vunpack.c.0.s8 %v426
        %v428 = vlaneseq
        %v429 = vshrl.u32 %v428, 7
        %v430 = vsub.s32 %v427, %v429
        %v431 = vrot.slane %v423, %v430
        %v433 = vunpack.c.l.s4 1934713408
        %v434 = vunpack.c.0.s8 %v433
        %v435 = vlaneseq
        %v436 = vshrl.u32 %v435, 7
        %v437 = vsub.s32 %v434, %v436
        %v438 = vrot.slane %v424, %v437
        %v439 = vcombine.low %v406, %v422
        %v440 = vcombine.high %v406, %v422
        %v442 = vunpack.c.l.s4 1934713408
        %v443 = vunpack.c.0.s8 %v442
        %v444 = vlaneseq
        %v445 = vshrl.u32 %v444, 7
        %v446 = vsub.s32 %v443, %v445
        %v447 = vrot.slane %v439, %v446
        %v449 = vunpack.c.l.s4 1934713408
        %v450 = vunpack.c.0.s8 %v449
        %v451 = vlaneseq
        %v452 = vshrl.u32 %v451, 7
        %v453 = vsub.s32 %v450, %v452
        %v454 = vrot.slane %v440, %v453
        %v455 = vcombine.high %v431, 0.0
        %v456 = vcombine.high %v438, 0.0
        %v457 = vcombine.high %v447, 0.0
        %v458 = vcombine.high %v454, 0.0
        %v459 = vcombine.low %v431, %v438
        %v461 = vunpack.c.l.s4 1983009808
        %v462 = vunpack.c.0.s8 %v461
        %v463 = vlaneseq
        %v464 = vshrl.u32 %v463, 7
        %v465 = vsub.s32 %v462, %v464
        %v466 = vrot.slane %v459, %v465
        %v467 = vcombine.low %v455, %v456
        %v469 = vunpack.c.l.s4 1983009808
        %v470 = vunpack.c.0.s8 %v469
        %v471 = vlaneseq
        %v472 = vshrl.u32 %v471, 7
        %v473 = vsub.s32 %v470, %v472
        %v474 = vrot.slane %v467, %v473
        %v475 = vcombine.low %v447, %v454
        %v477 = vunpack.c.l.s4 1983009808
        %v478 = vunpack.c.0.s8 %v477
        %v479 = vlaneseq
        %v480 = vshrl.u32 %v479, 7
        %v481 = vsub.s32 %v478, %v480
        %v482 = vrot.slane %v475, %v481
        %v483 = vcombine.low %v457, %v458
        %v485 = vunpack.c.l.s4 1983009808
        %v486 = vunpack.c.0.s8 %v485
        %v487 = vlaneseq
        %v488 = vshrl.u32 %v487, 7
        %v489 = vsub.s32 %v486, %v488
        %v490 = vrot.slane %v483, %v489
        %v491 = vcombine.low %v466, %v474
        %v492 = vcombine.high %v466, %v474
        %v494 = vunpack.c.l.s4 1934713408
        %v495 = vunpack.c.0.s8 %v494
        %v496 = vlaneseq
        %v497 = vshrl.u32 %v496, 7
        %v498 = vsub.s32 %v495, %v497
        %v499 = vrot.slane %v491, %v498
        %v501 = vunpack.c.l.s4 1934713408
        %v502 = vunpack.c.0.s8 %v501
        %v503 = vlaneseq
        %v504 = vshrl.u32 %v503, 7
        %v505 = vsub.s32 %v502, %v504
        %v506 = vrot.slane %v492, %v505
        %v507 = vcombine.low %v482, %v490
        %v508 = vcombine.high %v482, %v490
        %v510 = vunpack.c.l.s4 1934713408
        %v511 = vunpack.c.0.s8 %v510
        %v512 = vlaneseq
        %v513 = vshrl.u32 %v512, 7
        %v514 = vsub.s32 %v511, %v513
        %v515 = vrot.slane %v507, %v514
        %v517 = vunpack.c.l.s4 1934713408
        %v518 = vunpack.c.0.s8 %v517
        %v519 = vlaneseq
        %v520 = vshrl.u32 %v519, 7
        %v521 = vsub.s32 %v518, %v520
        %v522 = vrot.slane %v508, %v521
        %v523 = vcombine.low %v499, %v515
        %v524 = vcombine.high %v499, %v515
        %v525 = vcombine.low %v506, %v522
        %v526 = vcombine.high %v506, %v522
        %vm527 = vcmask 64512
        %528 = vst.msk [vmem:[%s279] sm:$0xff] %vm527, %v523
        %529 = vst.msk [vmem:[%s279 + $0x8] sm:$0xff] %vm527, %v524
        %530 = vst.msk [vmem:[%s279 + $0x10] sm:$0xff] %vm527, %v525
        %531 = vst.msk [vmem:[%s279 + $0x18] sm:$0xff] %vm527, %v526
        %533 = vrot.lane.b32.xlu0 %v377, 120
        %v534 = vpop.permute.xlu0 %533
        %535 = vrot.lane.b32.xlu0 %v377, 112
        %v536 = vpop.permute.xlu0 %535
        %537 = vrot.lane.b32.xlu0 %v377, 104
        %v538 = vpop.permute.xlu0 %537
        %539 = vrot.lane.b32.xlu0 %v377, 96
        %v540 = vpop.permute.xlu0 %539
        %541 = vrot.lane.b32.xlu0 %v534, 96
        %v542 = vpop.permute.xlu0 %541
        %543 = vrot.lane.b32.xlu0 %v536, 96
        %v544 = vpop.permute.xlu0 %543
        %545 = vrot.lane.b32.xlu0 %v538, 96
        %v546 = vpop.permute.xlu0 %545
        %v551 = vcombine.low %v540, %v544
        %v552 = vcombine.high %v540, %v544
        %v554 = vunpack.c.l.s4 1983009808
        %v555 = vunpack.c.0.s8 %v554
        %v556 = vlaneseq
        %v557 = vshrl.u32 %v556, 7
        %v558 = vsub.s32 %v555, %v557
        %v559 = vrot.slane %v551, %v558
        %v561 = vunpack.c.l.s4 1983009808
        %v562 = vunpack.c.0.s8 %v561
        %v563 = vlaneseq
        %v564 = vshrl.u32 %v563, 7
        %v565 = vsub.s32 %v562, %v564
        %v566 = vrot.slane %v552, %v565
        %v567 = vcombine.low %v542, %v546
        %v568 = vcombine.high %v542, %v546
        %v570 = vunpack.c.l.s4 1983009808
        %v571 = vunpack.c.0.s8 %v570
        %v572 = vlaneseq
        %v573 = vshrl.u32 %v572, 7
        %v574 = vsub.s32 %v571, %v573
        %v575 = vrot.slane %v567, %v574
        %v577 = vunpack.c.l.s4 1983009808
        %v578 = vunpack.c.0.s8 %v577
        %v579 = vlaneseq
        %v580 = vshrl.u32 %v579, 7
        %v581 = vsub.s32 %v578, %v580
        %v582 = vrot.slane %v568, %v581
        %v583 = vcombine.low %v559, %v575
        %v584 = vcombine.high %v559, %v575
        %v586 = vunpack.c.l.s4 1934713408
        %v587 = vunpack.c.0.s8 %v586
        %v588 = vlaneseq
        %v589 = vshrl.u32 %v588, 7
        %v590 = vsub.s32 %v587, %v589
        %v591 = vrot.slane %v583, %v590
        %v593 = vunpack.c.l.s4 1934713408
        %v594 = vunpack.c.0.s8 %v593
        %v595 = vlaneseq
        %v596 = vshrl.u32 %v595, 7
        %v597 = vsub.s32 %v594, %v596
        %v598 = vrot.slane %v584, %v597
        %v599 = vcombine.low %v566, %v582
        %v600 = vcombine.high %v566, %v582
        %v602 = vunpack.c.l.s4 1934713408
        %v603 = vunpack.c.0.s8 %v602
        %v604 = vlaneseq
        %v605 = vshrl.u32 %v604, 7
        %v606 = vsub.s32 %v603, %v605
        %v607 = vrot.slane %v599, %v606
        %v609 = vunpack.c.l.s4 1934713408
        %v610 = vunpack.c.0.s8 %v609
        %v611 = vlaneseq
        %v612 = vshrl.u32 %v611, 7
        %v613 = vsub.s32 %v610, %v612
        %v614 = vrot.slane %v600, %v613
        %v615 = vcombine.high %v591, 0.0
        %v616 = vcombine.high %v598, 0.0
        %v617 = vcombine.high %v607, 0.0
        %v618 = vcombine.high %v614, 0.0
        %v619 = vcombine.low %v591, %v598
        %v621 = vunpack.c.l.s4 1983009808
        %v622 = vunpack.c.0.s8 %v621
        %v623 = vlaneseq
        %v624 = vshrl.u32 %v623, 7
        %v625 = vsub.s32 %v622, %v624
        %v626 = vrot.slane %v619, %v625
        %v627 = vcombine.low %v615, %v616
        %v629 = vunpack.c.l.s4 1983009808
        %v630 = vunpack.c.0.s8 %v629
        %v631 = vlaneseq
        %v632 = vshrl.u32 %v631, 7
        %v633 = vsub.s32 %v630, %v632
        %v634 = vrot.slane %v627, %v633
        %v635 = vcombine.low %v607, %v614
        %v637 = vunpack.c.l.s4 1983009808
        %v638 = vunpack.c.0.s8 %v637
        %v639 = vlaneseq
        %v640 = vshrl.u32 %v639, 7
        %v641 = vsub.s32 %v638, %v640
        %v642 = vrot.slane %v635, %v641
        %v643 = vcombine.low %v617, %v618
        %v645 = vunpack.c.l.s4 1983009808
        %v646 = vunpack.c.0.s8 %v645
        %v647 = vlaneseq
        %v648 = vshrl.u32 %v647, 7
        %v649 = vsub.s32 %v646, %v648
        %v650 = vrot.slane %v643, %v649
        %v651 = vcombine.low %v626, %v634
        %v652 = vcombine.high %v626, %v634
        %v654 = vunpack.c.l.s4 1934713408
        %v655 = vunpack.c.0.s8 %v654
        %v656 = vlaneseq
        %v657 = vshrl.u32 %v656, 7
        %v658 = vsub.s32 %v655, %v657
        %v659 = vrot.slane %v651, %v658
        %v661 = vunpack.c.l.s4 1934713408
        %v662 = vunpack.c.0.s8 %v661
        %v663 = vlaneseq
        %v664 = vshrl.u32 %v663, 7
        %v665 = vsub.s32 %v662, %v664
        %v666 = vrot.slane %v652, %v665
        %v667 = vcombine.low %v642, %v650
        %v668 = vcombine.high %v642, %v650
        %v670 = vunpack.c.l.s4 1934713408
        %v671 = vunpack.c.0.s8 %v670
        %v672 = vlaneseq
        %v673 = vshrl.u32 %v672, 7
        %v674 = vsub.s32 %v671, %v673
        %v675 = vrot.slane %v667, %v674
        %v677 = vunpack.c.l.s4 1934713408
        %v678 = vunpack.c.0.s8 %v677
        %v679 = vlaneseq
        %v680 = vshrl.u32 %v679, 7
        %v681 = vsub.s32 %v678, %v680
        %v682 = vrot.slane %v668, %v681
        %v683 = vcombine.low %v659, %v675
        %v684 = vcombine.high %v659, %v675
        %v685 = vcombine.low %v666, %v682
        %v686 = vcombine.high %v666, %v682
        %687 = vst.msk [vmem:[%s286] sm:$0xff] %vm527, %v683
        %688 = vst.msk [vmem:[%s286 + $0x8] sm:$0xff] %vm527, %v684
        %689 = vst.msk [vmem:[%s286 + $0x10] sm:$0xff] %vm527, %v685
        %690 = vst.msk [vmem:[%s286 + $0x18] sm:$0xff] %vm527, %v686
        %691 = vrot.lane.b32.xlu0 %v377, 64
        %v692 = vpop.permute.xlu0 %691
        %693 = vrot.lane.b32.xlu0 %v534, 64
        %v694 = vpop.permute.xlu0 %693
        %695 = vrot.lane.b32.xlu0 %v536, 64
        %v696 = vpop.permute.xlu0 %695
        %697 = vrot.lane.b32.xlu0 %v538, 64
        %v698 = vpop.permute.xlu0 %697
        %v703 = vcombine.low %v692, %v696
        %v704 = vcombine.high %v692, %v696
        %v706 = vunpack.c.l.s4 1983009808
        %v707 = vunpack.c.0.s8 %v706
        %v708 = vlaneseq
        %v709 = vshrl.u32 %v708, 7
        %v710 = vsub.s32 %v707, %v709
        %v711 = vrot.slane %v703, %v710
        %v713 = vunpack.c.l.s4 1983009808
        %v714 = vunpack.c.0.s8 %v713
        %v715 = vlaneseq
        %v716 = vshrl.u32 %v715, 7
        %v717 = vsub.s32 %v714, %v716
        %v718 = vrot.slane %v704, %v717
        %v719 = vcombine.low %v694, %v698
        %v720 = vcombine.high %v694, %v698
        %v722 = vunpack.c.l.s4 1983009808
        %v723 = vunpack.c.0.s8 %v722
        %v724 = vlaneseq
        %v725 = vshrl.u32 %v724, 7
        %v726 = vsub.s32 %v723, %v725
        %v727 = vrot.slane %v719, %v726
        %v729 = vunpack.c.l.s4 1983009808
        %v730 = vunpack.c.0.s8 %v729
        %v731 = vlaneseq
        %v732 = vshrl.u32 %v731, 7
        %v733 = vsub.s32 %v730, %v732
        %v734 = vrot.slane %v720, %v733
        %v735 = vcombine.low %v711, %v727
        %v736 = vcombine.high %v711, %v727
        %v738 = vunpack.c.l.s4 1934713408
        %v739 = vunpack.c.0.s8 %v738
        %v740 = vlaneseq
        %v741 = vshrl.u32 %v740, 7
        %v742 = vsub.s32 %v739, %v741
        %v743 = vrot.slane %v735, %v742
        %v745 = vunpack.c.l.s4 1934713408
        %v746 = vunpack.c.0.s8 %v745
        %v747 = vlaneseq
        %v748 = vshrl.u32 %v747, 7
        %v749 = vsub.s32 %v746, %v748
        %v750 = vrot.slane %v736, %v749
        %v751 = vcombine.low %v718, %v734
        %v752 = vcombine.high %v718, %v734
        %v754 = vunpack.c.l.s4 1934713408
        %v755 = vunpack.c.0.s8 %v754
        %v756 = vlaneseq
        %v757 = vshrl.u32 %v756, 7
        %v758 = vsub.s32 %v755, %v757
        %v759 = vrot.slane %v751, %v758
        %v761 = vunpack.c.l.s4 1934713408
        %v762 = vunpack.c.0.s8 %v761
        %v763 = vlaneseq
        %v764 = vshrl.u32 %v763, 7
        %v765 = vsub.s32 %v762, %v764
        %v766 = vrot.slane %v752, %v765
        %v767 = vcombine.high %v743, 0.0
        %v768 = vcombine.high %v750, 0.0
        %v769 = vcombine.high %v759, 0.0
        %v770 = vcombine.high %v766, 0.0
        %v771 = vcombine.low %v743, %v750
        %v773 = vunpack.c.l.s4 1983009808
        %v774 = vunpack.c.0.s8 %v773
        %v775 = vlaneseq
        %v776 = vshrl.u32 %v775, 7
        %v777 = vsub.s32 %v774, %v776
        %v778 = vrot.slane %v771, %v777
        %v779 = vcombine.low %v767, %v768
        %v781 = vunpack.c.l.s4 1983009808
        %v782 = vunpack.c.0.s8 %v781
        %v783 = vlaneseq
        %v784 = vshrl.u32 %v783, 7
        %v785 = vsub.s32 %v782, %v784
        %v786 = vrot.slane %v779, %v785
        %v787 = vcombine.low %v759, %v766
        %v789 = vunpack.c.l.s4 1983009808
        %v790 = vunpack.c.0.s8 %v789
        %v791 = vlaneseq
        %v792 = vshrl.u32 %v791, 7
        %v793 = vsub.s32 %v790, %v792
        %v794 = vrot.slane %v787, %v793
        %v795 = vcombine.low %v769, %v770
        %v797 = vunpack.c.l.s4 1983009808
        %v798 = vunpack.c.0.s8 %v797
        %v799 = vlaneseq
        %v800 = vshrl.u32 %v799, 7
        %v801 = vsub.s32 %v798, %v800
        %v802 = vrot.slane %v795, %v801
        %v803 = vcombine.low %v778, %v786
        %v804 = vcombine.high %v778, %v786
        %v806 = vunpack.c.l.s4 1934713408
        %v807 = vunpack.c.0.s8 %v806
        %v808 = vlaneseq
        %v809 = vshrl.u32 %v808, 7
        %v810 = vsub.s32 %v807, %v809
        %v811 = vrot.slane %v803, %v810
        %v813 = vunpack.c.l.s4 1934713408
        %v814 = vunpack.c.0.s8 %v813
        %v815 = vlaneseq
        %v816 = vshrl.u32 %v815, 7
        %v817 = vsub.s32 %v814, %v816
        %v818 = vrot.slane %v804, %v817
        %v819 = vcombine.low %v794, %v802
        %v820 = vcombine.high %v794, %v802
        %v822 = vunpack.c.l.s4 1934713408
        %v823 = vunpack.c.0.s8 %v822
        %v824 = vlaneseq
        %v825 = vshrl.u32 %v824, 7
        %v826 = vsub.s32 %v823, %v825
        %v827 = vrot.slane %v819, %v826
        %v829 = vunpack.c.l.s4 1934713408
        %v830 = vunpack.c.0.s8 %v829
        %v831 = vlaneseq
        %v832 = vshrl.u32 %v831, 7
        %v833 = vsub.s32 %v830, %v832
        %v834 = vrot.slane %v820, %v833
        %v835 = vcombine.low %v811, %v827
        %v836 = vcombine.high %v811, %v827
        %v837 = vcombine.low %v818, %v834
        %v838 = vcombine.high %v818, %v834
        %839 = vst.msk [vmem:[%s293] sm:$0xff] %vm527, %v835
        %840 = vst.msk [vmem:[%s293 + $0x8] sm:$0xff] %vm527, %v836
        %841 = vst.msk [vmem:[%s293 + $0x10] sm:$0xff] %vm527, %v837
        %842 = vst.msk [vmem:[%s293 + $0x18] sm:$0xff] %vm527, %v838
        %s843 = sand.u32 %s119, 1
        %s844 = scalar_lea.sflag [#allocation4], %s843
        %s845 = sand.u32 %s119, 1
        %s846 = smul.addr %s845, 32
        %s847 = scalar_lea.vmem [#allocation7], %s846
        %s848 = sand.u32 %s27, 1
        %s849 = scalar_lea.sflag [#allocation9], %s848
        %s850 = sand.u32 %s147, 1
        %s851 = smul.addr %s850, 32
        %s852 = scalar_lea.vmem [#allocation8], %s851
        %s853 = sand.u32 %s27, 1
        %s854 = scalar_lea.sflag [#allocation9], %s853
        %s855 = sand.u32 %s175, 1
        %s856 = smul.addr %s855, 32
        %s857 = scalar_lea.vmem [#allocation10], %s856
        // Predicated region
        $region41: #{tpu_custom_call.1} parent=31 // pred_check
          %p858 = pneg %p129
        $region42: #{tpu_custom_call.1} parent=31 // pred_check_branch
          %860 = sbr.rel (%p858) target = $region44
        $region43: #{tpu_custom_call.1} parent=31 // pred_region
          %s862 = ssub.s32 512, 512
          %863 = vsyncadd %s844, %s862
          %s864 = smul.addr %s31, 4
          %s865 = sadd.s32 %s32, %s864
          %s866 = smul.addr %s865, 128
          %s867 = scalar_lea.hbm %s3, %s866
          %s868 = sshll.u32 %s847, 4
          %s869 = int_to_ptr.vmem [resolvable:$true] %s868
          %874 = dma.vmem_to_hbm [thread:$0]  %s869, 512, %s867, %s844, 128, 128, 8
        $region44: #{tpu_custom_call.1} parent=31 // pred_fallthru
          _
        // Predicated region
        $region45: #{tpu_custom_call.1} parent=31 // pred_check
          %p875 = pneg %p157
        $region46: #{tpu_custom_call.1} parent=31 // pred_check_branch
          %877 = sbr.rel (%p875) target = $region48
        $region47: #{tpu_custom_call.1} parent=31 // pred_region
          %s879 = ssub.s32 512, 512
          %880 = vsyncadd %s849, %s879
          %s881 = smul.addr %s31, 4
          %s882 = sadd.s32 %s32, %s881
          %s883 = smul.addr %s882, 128
          %s884 = scalar_lea.hbm %s4, %s883
          %s885 = sshll.u32 %s852, 4
          %s886 = int_to_ptr.vmem [resolvable:$true] %s885
          %891 = dma.vmem_to_hbm [thread:$0]  %s886, 512, %s884, %s849, 128, 128, 8
        $region48: #{tpu_custom_call.1} parent=31 // pred_fallthru
          _
        // Predicated region
        $region49: #{tpu_custom_call.1} parent=31 // pred_check
          %p892 = pneg %p185
        $region50: #{tpu_custom_call.1} parent=31 // pred_check_branch
          %894 = sbr.rel (%p892) target = $region52
        $region51: #{tpu_custom_call.1} parent=31 // pred_region
          %s896 = ssub.s32 512, 512
          %897 = vsyncadd %s854, %s896
          %s898 = smul.addr %s31, 4
          %s899 = sadd.s32 %s32, %s898
          %s900 = smul.addr %s899, 128
          %s901 = scalar_lea.hbm %s5, %s900
          %s902 = sshll.u32 %s857, 4
          %s903 = int_to_ptr.vmem [resolvable:$true] %s902
          %908 = dma.vmem_to_hbm [thread:$0]  %s903, 512, %s901, %s854, 128, 128, 8
        $region52: #{tpu_custom_call.1} parent=31 // pred_fallthru
          _
      $region32: #{tpu_custom_call.1} parent=5 // pred_fallthru
        _
      %p909 = scmp.le.s32.totalorder 2, %s22
      // Predicated region
      $region53: #{tpu_custom_call.1} parent=5 // pred_check
        %p910 = pneg %p909
      $region54: #{tpu_custom_call.1} parent=5 // pred_check_branch
        %912 = sbr.rel (%p910) target = $region56
      $region55: #{tpu_custom_call.1} parent=5 // pred_region
        %s913 = ssub.s32 %s22, 2
        // Predicated region
        $region57: #{tpu_custom_call.1} parent=55 // pred_check
          %p914 = pneg %p135
        $region58: #{tpu_custom_call.1} parent=55 // pred_check_branch
          %916 = sbr.rel (%p914) target = $region60
        $region59: #{tpu_custom_call.1} parent=55 // pred_region
          %s917 = sand.u32 %s120, 1
          %s918 = scalar_lea.sflag [#allocation4], %s917
          %s919 = sand.u32 %s120, 1
          %s920 = smul.addr %s919, 32
          %s921 = scalar_lea.vmem [#allocation7], %s920
          %922 = dma.done %s918, 512
        $region60: #{tpu_custom_call.1} parent=55 // pred_fallthru
          _
        // Predicated region
        $region61: #{tpu_custom_call.1} parent=55 // pred_check
          %p923 = pneg %p163
        $region62: #{tpu_custom_call.1} parent=55 // pred_check_branch
          %925 = sbr.rel (%p923) target = $region64
        $region63: #{tpu_custom_call.1} parent=55 // pred_region
          %s926 = sand.u32 %s28, 1
          %s927 = scalar_lea.sflag [#allocation9], %s926
          %s928 = sand.u32 %s148, 1
          %s929 = smul.addr %s928, 32
          %s930 = scalar_lea.vmem [#allocation8], %s929
          %931 = dma.done %s927, 512
        $region64: #{tpu_custom_call.1} parent=55 // pred_fallthru
          _
        // Predicated region
        $region65: #{tpu_custom_call.1} parent=55 // pred_check
          %p932 = pneg %p191
        $region66: #{tpu_custom_call.1} parent=55 // pred_check_branch
          %934 = sbr.rel (%p932) target = $region68
        $region67: #{tpu_custom_call.1} parent=55 // pred_region
          %s935 = sand.u32 %s28, 1
          %s936 = scalar_lea.sflag [#allocation9], %s935
          %s937 = sand.u32 %s176, 1
          %s938 = smul.addr %s937, 32
          %s939 = scalar_lea.vmem [#allocation10], %s938
          %940 = dma.done %s936, 512
        $region68: #{tpu_custom_call.1} parent=55 // pred_fallthru
          _
      $region56: #{tpu_custom_call.1} parent=5 // pred_fallthru
        _
    $region6: #{tpu_custom_call.1} parent=1 // loop_footer
      %s26 = sadd.s32 1, %s22
    $region7: #{tpu_custom_call.1} parent=1 // loop_footer_branch
      %21 = sbr.rel target = $region3
    $region8: #{tpu_custom_call.1} parent=1 // loop_exit
      _
    %941 = vsyncpa [#allocation3], 1
    %s942 = scalar_lea.sflag [#allocation3], 1
    %943 = vsyncpa %s942, 1
    %944 = vsyncpa [#allocation6], 1
    %945 = vsyncpa [#allocation4], 1
    %s946 = scalar_lea.sflag [#allocation4], 1
    %947 = vsyncpa %s946, 1
    %948 = vsyncpa [#allocation9], 1
    %s949 = scalar_lea.sflag [#allocation9], 1
    %950 = vsyncpa %s949, 1

</llo_original>
